<compile_context>
chip_gen: v7x
topology: tpu7x:2x2x1
jax: 0.10.0
libtpu: 0.0.40
codegen_flags: <defaults>
</compile_context>

<pallas_src>
import jax
import jax.numpy as jnp
from jax.experimental import pallas as pl
from jax.experimental.pallas import tpu as pltpu


def mlp_kernel(x_ref, w_ref, b_ref, o_ref):
    # One MXU pass: x_tile @ W_folded, f32 accumulate, narrow (tb, out_dim) store.
    # The masked vst for the width-2 store is irrelevant: this kernel is
    # HBM-read bound, VPU/MXU/vst slots are idle.
    acc = jnp.dot(x_ref[...], w_ref[...], preferred_element_type=jnp.float32)
    o_ref[...] = (acc + b_ref[...]).astype(o_ref.dtype)


def fold_params(w1, b1, w2, b2, w3, b3):
    """Fold fc3(fc2(fc1(.))) into a single exact affine map (tiny K x 2 math).

    Hoisted out of the forward so the three micro-matmuls are dispatched once
    per parameter set, not once per call."""
    w = w1 @ w2 @ w3                      # (K, 2)
    b = (b1 @ w2 + b2) @ w3 + b3          # (1, 2)
    return w, b


def _pick_batch_tile(batch, block_b):
    """Choose the batch tile.

    - batch <= 8: one block covering the whole batch (legal: block == array dims).
    - otherwise: <= block_b, multiple of 8, at least 2 grid steps (keeps both
      v7x TensorCores busy), and — when possible — an exact divisor of batch so
      no jnp.pad copy of x and no post-kernel row trim are emitted.
    """
    if batch <= 8:
        return batch
    target = min(block_b, pl.cdiv(batch, 2))
    target = max(8, (target // 8) * 8)
    if batch % 8 == 0:
        tb = target
        while tb >= 8:
            if batch % tb == 0:
                return tb
            tb -= 8
    return target  # ragged batch -> pad only the tail rows


def mlp_forward(x, w, b, *, block_b=4096):
    """y = x @ w + b with the folded parameters, streamed over the batch.

    block_b defaults to 4096: at K=32 the double-buffered x tile is ~1 MiB,
    far under VMEM limits on all generations, and large enough that the
    ~0.35 us per-grid-step overhead is amortized (matters most on v7x/v6e).
    """
    B, K = x.shape
    out_dim = w.shape[1]

    tb = _pick_batch_tile(B, block_b)
    grid_b = pl.cdiv(B, tb)
    b_padded = grid_b * tb
    # Only materialize a padded copy of x for ragged batches that no multiple-of-8
    # tile divides; the common path emits no extra HBM pass.
    x_in = x if b_padded == B else jnp.pad(x, ((0, b_padded - B), (0, 0)))

    itemsize = jnp.dtype(x.dtype).itemsize
    cost = pl.CostEstimate(
        flops=2 * b_padded * K * out_dim,
        transcendentals=0,
        bytes_accessed=(b_padded * K + K * out_dim + out_dim) * itemsize
        + b_padded * out_dim * itemsize,
    )

    out = pl.pallas_call(
        mlp_kernel,
        out_shape=jax.ShapeDtypeStruct((b_padded, out_dim), x.dtype),
        grid=(grid_b,),
        in_specs=[
            # Stream x over the batch (default double-buffered pipeline).
            pl.BlockSpec((tb, K), lambda i: (i, 0)),
            # Folded W / b: constant index_map -> stay VMEM-resident across the
            # grid. (No deeper buffering: one streaming input, no exposed DMA.)
            pl.BlockSpec((K, out_dim), lambda i: (0, 0)),
            pl.BlockSpec((1, out_dim), lambda i: (0, 0)),
        ],
        out_specs=pl.BlockSpec((tb, out_dim), lambda i: (i, 0)),
        compiler_params=pltpu.CompilerParams(
            dimension_semantics=("parallel",),  # shard batch grid across TCs (v7x)
        ),
        cost_estimate=cost,
    )(x_in, w, b)

    # Trivial row trim only when batch padding was unavoidable.
    return out if b_padded == B else out[:B]
    # Note: for v5e, streaming x in bf16 (cast at the call boundary, f32 MXU
    # accumulation kept) would halve the dominant read traffic; left at f32
    # here to match the module's f32 semantics within tight tolerance.


def init_params(key, input_size):
    # Deterministic init mimicking nn.Linear's uniform(-1/sqrt(fan_in), 1/sqrt(fan_in)).
    ks = jax.random.split(key, 6)

    def lin(kw, kb, fan_in, fan_out):
        bound = 1.0 / jnp.sqrt(jnp.asarray(fan_in, jnp.float32))
        w = jax.random.uniform(kw, (fan_in, fan_out), jnp.float32, -bound, bound)
        b = jax.random.uniform(kb, (1, fan_out), jnp.float32, -bound, bound)
        return w, b

    w1, b1 = lin(ks[0], ks[1], input_size, 10)
    w2, b2 = lin(ks[2], ks[3], 10, 5)
    w3, b3 = lin(ks[4], ks[5], 5, 2)
    return w1, b1, w2, b2, w3, b3


if __name__ == "__main__":
    key = jax.random.PRNGKey(0)
    k_x, k_p = jax.random.split(key)

    batch = 8
    input_size = 32
    x = jax.random.normal(k_x, (batch, input_size), jnp.float32)
    params = init_params(k_p, input_size)

    # Fold once per parameter set (hoisted out of the forward pass).
    w_fold, b_fold = fold_params(*params)

    out = jax.block_until_ready(mlp_forward(x, w_fold, b_fold))

    # Reference: the unfolded per-layer math (true module semantics).
    w1, b1, w2, b2, w3, b3 = params
    ref = ((x @ w1 + b1) @ w2 + b2) @ w3 + b3
    assert out.shape == (batch, 2), out.shape
    assert jnp.allclose(out, ref, atol=1e-4, rtol=1e-4), float(jnp.max(jnp.abs(out - ref)))

    print("KERNEL_OK")
</pallas_src>

<mosaic_0001>
module attributes {stable_mosaic.version = 11 : i64} {
  func.func @mlp_kernel(%arg0: i32, %arg1: memref<8x32xf32, #tpu.memory_space<vmem>>, %arg2: memref<32x2xf32, #tpu.memory_space<vmem>>, %arg3: memref<1x2xf32, #tpu.memory_space<vmem>>, %arg4: memref<8x2xf32, #tpu.memory_space<vmem>>) attributes {dimension_semantics = [#tpu.dimension_semantics<parallel>], iteration_bounds = array<i64: 1>, scalar_prefetch = 0 : i64, scratch_operands = 0 : i64, tpu.core_type = #tpu.core_type<tc>, window_params = [{transform_indices = @transform_0, window_bounds = array<i64: 8, 32>}, {pipeline_mode = #tpu.pipeline_mode<synchronous>, transform_indices = @transform_1, window_bounds = array<i64: 32, 2>}, {pipeline_mode = #tpu.pipeline_mode<synchronous>, transform_indices = @transform_2, window_bounds = array<i64: 1, 2>}, {transform_indices = @transform_3, window_bounds = array<i64: 8, 2>}]} {
    %c0 = arith.constant 0 : index
    %c0_0 = arith.constant 0 : index
    %0 = vector.load %arg1[%c0, %c0_0] : memref<8x32xf32, #tpu.memory_space<vmem>>, vector<8x32xf32>
    %c0_1 = arith.constant 0 : index
    %c0_2 = arith.constant 0 : index
    %1 = vector.load %arg2[%c0_1, %c0_2] : memref<32x2xf32, #tpu.memory_space<vmem>>, vector<32x2xf32>
    %cst = arith.constant dense<0.000000e+00> : vector<8x2xf32>
    %2 = tpu.matmul %0, %1, %cst {dimension_numbers = #tpu.dot_dimension_numbers<[1], [0], [0], [1], [0, 0, 1, 1], [], []>} : vector<8x32xf32>, vector<32x2xf32>, vector<8x2xf32> -> vector<8x2xf32>
    %c0_3 = arith.constant 0 : index
    %c0_4 = arith.constant 0 : index
    %3 = vector.load %arg3[%c0_3, %c0_4] : memref<1x2xf32, #tpu.memory_space<vmem>>, vector<1x2xf32>
    %4 = vector.broadcast %3 : vector<1x2xf32> to vector<8x2xf32>
    %5 = arith.addf %2, %4 : vector<8x2xf32>
    %c0_5 = arith.constant 0 : index
    %c0_6 = arith.constant 0 : index
    %6 = vector.load %arg4[%c0_5, %c0_6] : memref<8x2xf32, #tpu.memory_space<vmem>>, vector<8x2xf32>
    tpu.vector_store %arg4[%c0_5, %c0_6], %5 {strides = array<i32>} : memref<8x2xf32, #tpu.memory_space<vmem>>, vector<8x2xf32>,
    return
  }
  func.func @transform_0(%arg0: i32) -> (i32, i32) {
    %c0_i32 = arith.constant 0 : i32
    %c0_i32_0 = arith.constant 0 : i32
    return %arg0, %c0_i32 : i32, i32
  }
  func.func @transform_1(%arg0: i32) -> (i32, i32) {
    %c0_i32 = arith.constant 0 : i32
    %c0_i32_0 = arith.constant 0 : i32
    %c0_i32_1 = arith.constant 0 : i32
    return %c0_i32, %c0_i32_0 : i32, i32
  }
  func.func @transform_2(%arg0: i32) -> (i32, i32) {
    %c0_i32 = arith.constant 0 : i32
    %c0_i32_0 = arith.constant 0 : i32
    %c0_i32_1 = arith.constant 0 : i32
    return %c0_i32, %c0_i32_0 : i32, i32
  }
  func.func @transform_3(%arg0: i32) -> (i32, i32) {
    %c0_i32 = arith.constant 0 : i32
    %c0_i32_0 = arith.constant 0 : i32
    return %arg0, %c0_i32 : i32, i32
  }
}

</mosaic_0001>

<llo_original>
// kernel: tpu_custom_call.1
$region0: #{tpu_custom_call.1}
  #allocation0 [shape = 'u32[]', space=smem, size = 0x4, offset = 0x4, fixed_abs, tag = 'smem constant byte address 0x4 - core index']
  #allocation1 [shape = 'u32[144,128]{1,0:T(1,128)}', space=vmem, size = 0x12000, scoped, tag = 'internal scratch']
  %s0 = inlined_call_operand.vmem [shape: f32[8,32], index: 0, kind: input, shape index: {}]
  %s1 = inlined_call_operand.vmem [shape: f32[32,2], index: 1, kind: input, shape index: {}]
  %s2 = inlined_call_operand.vmem [shape: f32[1,2], index: 2, kind: input, shape index: {}]
  %s3 = inlined_call_operand.vmem [shape: f32[8,2], index: 3, kind: output, shape index: {}]
  %s4 = sld [smem:[#allocation0]]
  $region22: #{tpu_custom_call.1} parent=0
    _
  %s6 = ssub.s32 1, %s4
  %s7 = scalar_select 0, %s6, %s4
  // Predicated region
  $region2: #{tpu_custom_call.1} parent=0 // pred_check
    _
  $region3: #{tpu_custom_call.1} parent=0 // pred_check_branch
    %9 = sbr.rel (0) target = $region5
  $region4: #{tpu_custom_call.1} parent=0 // pred_region
    _
  $region5: #{tpu_custom_call.1} parent=0 // pred_fallthru
    _
  // Predicated region
  $region6: #{tpu_custom_call.1} parent=0 // pred_check
    _
  $region7: #{tpu_custom_call.1} parent=0 // pred_check_branch
    %11 = sbr.rel (0) target = $region9
  $region8: #{tpu_custom_call.1} parent=0 // pred_region
    _
  $region9: #{tpu_custom_call.1} parent=0 // pred_fallthru
    _
  // Predicated region
  $region10: #{tpu_custom_call.1} parent=0 // pred_check
    _
  $region11: #{tpu_custom_call.1} parent=0 // pred_check_branch
    %13 = sbr.rel (0) target = $region13
  $region12: #{tpu_custom_call.1} parent=0 // pred_region
    _
  $region13: #{tpu_custom_call.1} parent=0 // pred_fallthru
    _
  %v14 = vld [vmem:[%s0] sm:$0xff]
  %v15 = vld [vmem:[%s1] sm:$0xff]
  %v16 = vld [vmem:[%s1 + $0x8] sm:$0xff]
  %v17 = vld [vmem:[%s1 + $0x10] sm:$0xff]
  %v18 = vld [vmem:[%s1 + $0x18] sm:$0xff]
  %v19 = vld [vmem:[%s2] sm:$0x1]
  %v21 = vlaneseq
  %v22 = vshrl.u32 %v21, 7
  %v23 = vsub.s32 0, %v22
  %v24 = vrot.slane %v19, %v23
  %vm26 = vcmask 261120
  %v28 = vsel %vm26, %v14, 0
  %30 = vmatprep.subr.mxu0 0.0
  %31 = vmatpush1.msra.mxu0 %v15
  %32 = vmatprep.subr.mxu0 0.0
  %33 = vmatpush1.msra.mxu0 %v16
  %34 = vmatprep.subr.mxu0 0.0
  %35 = vmatpush1.msra.mxu0 %v17
  %36 = vmatprep.subr.mxu0 0.0
  %37 = vmatpush1.msra.mxu0 %v18
  %38 = vmatprep.subr.mxu0 0.0
  %39 = vmatpush1.msra.mxu0 0.0
  %40 = vmatprep.subr.mxu0 0.0
  %41 = vmatpush1.msra.mxu0 0.0
  %42 = vmatprep.subr.mxu0 0.0
  %43 = vmatpush1.msra.mxu0 0.0
  %44 = vmatprep.subr.mxu0 0.0
  %45 = vmatpush1.msra.mxu0 0.0
  %46 = vmatprep.subr.mxu0 0.0
  %47 = vmatpush1.msra.mxu0 0.0
  %48 = vmatprep.subr.mxu0 0.0
  %49 = vmatpush1.msra.mxu0 0.0
  %50 = vmatprep.subr.mxu0 0.0
  %51 = vmatpush1.msra.mxu0 0.0
  %52 = vmatprep.subr.mxu0 0.0
  %53 = vmatpush1.msra.mxu0 0.0
  %54 = vmatprep.subr.mxu0 0.0
  %55 = vmatpush1.msra.mxu0 0.0
  %56 = vmatprep.subr.mxu0 0.0
  %57 = vmatpush1.msra.mxu0 0.0
  %58 = vmatprep.subr.mxu0 0.0
  %59 = vmatpush1.msra.mxu0 0.0
  %60 = vmatprep.subr.mxu0 0.0
  %61 = vmatpush1.msra.mxu0 0.0
  %62 = vmatprep.subr.mxu0 0.0
  %63 = vmatpush1.msra.mxu0 0.0
  %64 = vmatprep.subr.mxu0 0.0
  %65 = vmatpush1.msra.mxu0 0.0
  %66 = vmatprep.subr.mxu0 0.0
  %67 = vmatpush1.msra.mxu0 0.0
  %68 = vmatprep.subr.mxu0 0.0
  %69 = vmatpush1.msra.mxu0 0.0
  %70 = vmatprep.subr.mxu0 0.0
  %71 = vmatpush1.msra.mxu0 0.0
  %72 = vmatprep.subr.mxu0 0.0
  %73 = vmatpush1.msra.mxu0 0.0
  %74 = vmatprep.subr.mxu0 0.0
  %75 = vmatpush1.msra.mxu0 0.0
  %76 = vmatprep.subr.mxu0 0.0
  %77 = vmatpush1.msra.mxu0 0.0
  %78 = vmatprep.subr.mxu0 0.0
  %79 = vmatpush1.msra.mxu0 0.0
  %80 = vmatprep.subr.mxu0 0.0
  %81 = vmatpush1.msra.mxu0 0.0
  %82 = vmatprep.subr.mxu0 0.0
  %83 = vmatpush1.msra.mxu0 0.0
  %84 = vmatprep.subr.mxu0 0.0
  %85 = vmatpush1.msra.mxu0 0.0
  %86 = vmatprep.subr.mxu0 0.0
  %87 = vmatpush1.msra.mxu0 0.0
  %88 = vmatprep.subr.mxu0 0.0
  %89 = vmatpush1.msra.mxu0 0.0
  %90 = vmatprep.subr.mxu0 0.0
  %91 = vmatpush1.msra.mxu0 0.0
  %92 = vmatprep.subr.mxu0 0.0
  %93 = vmatpush1.msra.mxu0 0.0
  %94 = vmatprep.mubr.f32.mxu0 0.0
  %95 = vmatmul.mubr.f32.gmra.mrb[0].mxu0 %v28
  %v96 = vpop.f32.mrb[0].mxu0
  %v97 = vadd.f32 %v24, %v96
  %v98 = vpop.f32.mrb[0].mxu0
  %99 = vdwg.mxu0
  %vm100 = vcmask 15360
  %101 = vst.msk [vmem:[%s3] sm:$0xff] %vm100, %v97
  // Predicated region
  $region14: #{tpu_custom_call.1} parent=0 // pred_check
    _
  $region15: #{tpu_custom_call.1} parent=0 // pred_check_branch
    %103 = sbr.rel (0) target = $region17
  $region16: #{tpu_custom_call.1} parent=0 // pred_region
    _
  $region17: #{tpu_custom_call.1} parent=0 // pred_fallthru
    _
  // Predicated region
  $region18: #{tpu_custom_call.1} parent=0 // pred_check
    _
  $region19: #{tpu_custom_call.1} parent=0 // pred_check_branch
    %105 = sbr.rel (0) target = $region21
  $region20: #{tpu_custom_call.1} parent=0 // pred_region
    _
  $region21: #{tpu_custom_call.1} parent=0 // pred_fallthru
    _

</llo_original>
